<compile_context>
chip_gen: v5e
topology: v5e:2x2
jax: 0.10.0
libtpu: 0.0.40
codegen_flags: <defaults>
</compile_context>

<pallas_src>
import functools

import jax
import jax.numpy as jnp
from jax.experimental import pallas as pl
from jax.experimental.pallas import tpu as pltpu


# ----------------------------------------------------------------------------- kernels
def _relu_conv_stats_kernel(p_ref, w_ref, z_ref, s_ref, ss_ref):
    """ReLU + conv-as-matmul + partial BN statistics for one M block.

    p_ref : (K, TM)      transposed im2col patch tile (f32)
    w_ref : (C_out, K)   conv weight, (kh,kw,ci)-flattened (f32)
    z_ref : (C_out, TM)  conv output tile (f32)
    s_ref, ss_ref : (1, C_out, 1) per-block partial sum / sum-of-squares
    """
    x = jnp.maximum(p_ref[...], 0.0)                       # ReLU in f32 (v5e-safe VPU)
    z = jax.lax.dot_general(                               # MXU: bf16 inputs, f32 acc
        w_ref[...].astype(jnp.bfloat16),
        x.astype(jnp.bfloat16),
        dimension_numbers=(((1,), (0,)), ((), ())),
        preferred_element_type=jnp.float32)                # (C_out, TM)
    z_ref[...] = z
    # Zero-padded M columns contribute exactly 0 to both partial sums.
    s_ref[0] = jnp.sum(z, axis=1, keepdims=True)           # (C_out, 1)
    ss_ref[0] = jnp.sum(z * z, axis=1, keepdims=True)      # (C_out, 1)


def _bn_apply_kernel(z_ref, scale_ref, shift_ref, o_ref):
    """Apply the (globally reduced) BatchNorm transform per tile.

    z_ref : (C_out, TM);  scale/shift : (C_out, 1);  o_ref : (C_out, TM)
    """
    o_ref[...] = z_ref[...] * scale_ref[...] + shift_ref[...]


# ----------------------------------------------------------------------------- helpers
def _round_up(x, m):
    return -(-x // m) * m


def _pick_block_m(m_total, k_dim, c_out, budget_bytes=4 << 20):
    """Largest M tile (multiple of 128) whose double-buffered f32 footprint fits budget."""
    per_col = 4 * (k_dim + 2 * c_out)                      # bytes per M column (in + out)
    tm = (budget_bytes // (2 * per_col)) // 128 * 128
    tm = max(128, min(2048, tm))
    return min(tm, _round_up(m_total, 128))


# ----------------------------------------------------------------------------- wrapper
def relu_conv_bn(x, w, gamma, beta, *, stride, padding, eps=1e-3, block_m=None):
    """Pallas implementation of ReLUConvBN.forward.  x: NCHW, w: (C_out, C_in, k, k)."""
    N, C_in, H, W = x.shape
    C_out, C_in2, k, k2 = w.shape
    assert C_in2 == C_in and k2 == k
    Ho = (H + 2 * padding - k) // stride + 1
    Wo = (W + 2 * padding - k) // stride + 1
    M = N * Ho * Wo
    K = k * k * C_in

    xp = x if padding == 0 else jnp.pad(
        x, ((0, 0), (0, 0), (padding, padding), (padding, padding)))

    # Transposed im2col: (K, M) with K ordered (kh, kw, ci) and M ordered (n, ho, wo).
    # Stride is folded in here -> only the strided output positions are materialized.
    taps = []
    for kh in range(k):
        for kw in range(k):
            taps.append(xp[:, :,
                           kh:kh + stride * (Ho - 1) + 1:stride,
                           kw:kw + stride * (Wo - 1) + 1:stride])
    patches = jnp.stack(taps, axis=0)                      # (k*k, N, C_in, Ho, Wo)
    patches = patches.transpose(0, 2, 1, 3, 4).reshape(K, M)

    TM = block_m if block_m is not None else _pick_block_m(M, K, C_out)
    assert TM % 128 == 0
    Mp = _round_up(M, TM)
    if Mp != M:                                            # zero cols -> zero stats
        patches = jnp.pad(patches, ((0, 0), (0, Mp - M)))
    G = Mp // TM

    w_mat = w.transpose(0, 2, 3, 1).reshape(C_out, K)      # (C_out, (kh,kw,ci))

    cparams = pltpu.CompilerParams(
        dimension_semantics=("parallel",),                 # independent M blocks
        vmem_limit_bytes=32 * 1024 * 1024)                 # explicit, v7x-safe

    # ---- pass 1: ReLU + conv + partial BN statistics (tiled over M) -----------------
    z, psum, psumsq = pl.pallas_call(
        _relu_conv_stats_kernel,
        out_shape=(jax.ShapeDtypeStruct((C_out, Mp), jnp.float32),
                   jax.ShapeDtypeStruct((G, C_out, 1), jnp.float32),
                   jax.ShapeDtypeStruct((G, C_out, 1), jnp.float32)),
        grid_spec=pltpu.PrefetchScalarGridSpec(
            num_scalar_prefetch=0,
            grid=(G,),
            in_specs=[pl.BlockSpec((K, TM), lambda m: (0, m)),
                      pl.BlockSpec((C_out, K), lambda m: (0, 0))],
            out_specs=(pl.BlockSpec((C_out, TM), lambda m: (0, m)),
                       pl.BlockSpec((1, C_out, 1), lambda m: (m, 0, 0)),
                       pl.BlockSpec((1, C_out, 1), lambda m: (m, 0, 0)))),
        compiler_params=cparams,
        cost_estimate=pl.CostEstimate(
            flops=2 * Mp * K * C_out, transcendentals=0,
            bytes_accessed=4 * (K * Mp + C_out * K + C_out * Mp)),
    )(patches, w_mat)

    # ---- global BatchNorm2d batch statistics (biased variance), tiny O(C_out) -------
    total = jnp.sum(psum, axis=(0, 2))
    total_sq = jnp.sum(psumsq, axis=(0, 2))
    mean = total / M
    var = total_sq / M - mean * mean
    scale = gamma * jax.lax.rsqrt(var + eps)
    shift = beta - mean * scale

    # ---- pass 2: apply normalization per tile ----------------------------------------
    out_t = pl.pallas_call(
        _bn_apply_kernel,
        out_shape=jax.ShapeDtypeStruct((C_out, Mp), jnp.float32),
        grid_spec=pltpu.PrefetchScalarGridSpec(
            num_scalar_prefetch=0,
            grid=(G,),
            in_specs=[pl.BlockSpec((C_out, TM), lambda m: (0, m)),
                      pl.BlockSpec((C_out, 1), lambda m: (0, 0)),
                      pl.BlockSpec((C_out, 1), lambda m: (0, 0))],
            out_specs=pl.BlockSpec((C_out, TM), lambda m: (0, m))),
        compiler_params=cparams,
        cost_estimate=pl.CostEstimate(
            flops=2 * Mp * C_out, transcendentals=0,
            bytes_accessed=4 * (2 * C_out * Mp + 2 * C_out)),
    )(z, scale.reshape(C_out, 1), shift.reshape(C_out, 1))

    return out_t[:, :M].reshape(C_out, N, Ho, Wo).transpose(1, 0, 2, 3)   # -> NCHW


# ----------------------------------------------------------------------------- reference
def relu_conv_bn_ref(x, w, gamma, beta, *, stride, padding, eps=1e-3):
    """Pure-JAX reference matching the PyTorch module's forward semantics."""
    y = jnp.maximum(x, 0.0)
    z = jax.lax.conv_general_dilated(
        y, w, window_strides=(stride, stride),
        padding=[(padding, padding), (padding, padding)],
        dimension_numbers=("NCHW", "OIHW", "NCHW"))
    mean = jnp.mean(z, axis=(0, 2, 3), keepdims=True)
    var = jnp.mean(jnp.square(z - mean), axis=(0, 2, 3), keepdims=True)
    zn = (z - mean) * jax.lax.rsqrt(var + eps)
    return zn * gamma.reshape(1, -1, 1, 1) + beta.reshape(1, -1, 1, 1)


# ----------------------------------------------------------------------------- main
if __name__ == "__main__":
    key = jax.random.PRNGKey(0)

    # (N, C_in, C_out, H, W, k, stride, padding, block_m)
    configs = [
        (2, 16, 32, 16, 16, 1, 1, 0, 128),   # 1x1 ReLUConvBN (common NAS case); M=512 -> 4 tiles
        (2, 8, 16, 16, 16, 3, 2, 1, None),   # 3x3, stride 2, padding 1; M=128 -> 1 tile
    ]

    fn = jax.jit(relu_conv_bn,
                 static_argnames=("stride", "padding", "eps", "block_m"))

    for idx, (N, C_in, C_out, H, W, k, s, p, bm) in enumerate(configs):
        ks = jax.random.split(jax.random.fold_in(key, idx), 4)
        x = jax.random.normal(ks[0], (N, C_in, H, W), jnp.float32)
        w = 0.2 * jax.random.normal(ks[1], (C_out, C_in, k, k), jnp.float32)
        gamma = 1.0 + 0.1 * jax.random.normal(ks[2], (C_out,), jnp.float32)
        beta = 0.1 * jax.random.normal(ks[3], (C_out,), jnp.float32)

        out = jax.block_until_ready(
            fn(x, w, gamma, beta, stride=s, padding=p, block_m=bm))
        ref = jax.block_until_ready(
            relu_conv_bn_ref(x, w, gamma, beta, stride=s, padding=p))

        Ho = (H + 2 * p - k) // s + 1
        assert out.shape == (N, C_out, Ho, Ho), out.shape
        # Tolerance reflects bf16 MXU operands (f32 accumulation) vs. a pure-f32 reference.
        max_err = float(jnp.max(jnp.abs(out - ref)))
        assert jnp.allclose(out, ref, atol=3e-2, rtol=3e-2), max_err

    # TODO(synk): BatchNorm2d running_mean/running_var buffer updates (training-mode side
    # effects) and eval-mode running-stats normalization are not materialized; the
    # forward output above uses training-mode batch statistics like the PyTorch module.
    print("KERNEL_OK")
</pallas_src>

<mosaic_0001>
module attributes {stable_mosaic.version = 11 : i64} {
  func.func @_relu_conv_stats_kernel(%arg0: i32, %arg1: memref<16x128xf32, #tpu.memory_space<vmem>>, %arg2: memref<32x16xf32, #tpu.memory_space<vmem>>, %arg3: memref<32x128xf32, #tpu.memory_space<vmem>>, %arg4: memref<1x32x1xf32, #tpu.memory_space<vmem>>, %arg5: memref<1x32x1xf32, #tpu.memory_space<vmem>>) attributes {dimension_semantics = [#tpu.dimension_semantics<parallel>], iteration_bounds = array<i64: 4>, scalar_prefetch = 0 : i64, scratch_operands = 0 : i64, tpu.core_type = #tpu.core_type<tc>, window_params = [{transform_indices = @transform_0, window_bounds = array<i64: 16, 128>}, {pipeline_mode = #tpu.pipeline_mode<synchronous>, transform_indices = @transform_1, window_bounds = array<i64: 32, 16>}, {transform_indices = @transform_2, window_bounds = array<i64: 32, 128>}, {transform_indices = @transform_3, window_bounds = array<i64: 1, 32, 1>}, {transform_indices = @transform_4, window_bounds = array<i64: 1, 32, 1>}]} {
    %c0 = arith.constant 0 : index
    %c0_0 = arith.constant 0 : index
    %0 = vector.load %arg1[%c0, %c0_0] : memref<16x128xf32, #tpu.memory_space<vmem>>, vector<16x128xf32>
    %cst = arith.constant 0.000000e+00 : f32
    %1 = vector.broadcast %cst : f32 to vector<16x128xf32>
    %2 = arith.maximumf %0, %1 : vector<16x128xf32>
    %c0_1 = arith.constant 0 : index
    %c0_2 = arith.constant 0 : index
    %3 = vector.load %arg2[%c0_1, %c0_2] : memref<32x16xf32, #tpu.memory_space<vmem>>, vector<32x16xf32>
    %4 = arith.truncf %3 : vector<32x16xf32> to vector<32x16xbf16>
    %5 = arith.truncf %2 : vector<16x128xf32> to vector<16x128xbf16>
    %cst_3 = arith.constant dense<0.000000e+00> : vector<32x128xf32>
    %6 = tpu.matmul %4, %5, %cst_3 {dimension_numbers = #tpu.dot_dimension_numbers<[1], [0], [0], [1], [0, 0, 1, 1], [], []>} : vector<32x16xbf16>, vector<16x128xbf16>, vector<32x128xf32> -> vector<32x128xf32>
    %c0_4 = arith.constant 0 : index
    %c0_5 = arith.constant 0 : index
    %7 = vector.load %arg3[%c0_4, %c0_5] : memref<32x128xf32, #tpu.memory_space<vmem>>, vector<32x128xf32>
    tpu.vector_store %arg3[%c0_4, %c0_5], %6 {strides = array<i32>} : memref<32x128xf32, #tpu.memory_space<vmem>>, vector<32x128xf32>,
    %cst_6 = arith.constant dense<0.000000e+00> : vector<32xf32>
    %8 = vector.multi_reduction <add>, %6, %cst_6 [1] : vector<32x128xf32> to vector<32xf32>
    %9 = vector.shape_cast %8 : vector<32xf32> to vector<32x1xf32>
    %c0_7 = arith.constant 0 : index
    %c0_8 = arith.constant 0 : index
    %c0_9 = arith.constant 0 : index
    %10 = vector.load %arg4[%c0_7, %c0_8, %c0_9] : memref<1x32x1xf32, #tpu.memory_space<vmem>>, vector<1x32x1xf32>
    %11 = vector.shape_cast %10 : vector<1x32x1xf32> to vector<32x1xf32>
    %12 = vector.shape_cast %9 : vector<32x1xf32> to vector<1x32x1xf32>
    tpu.vector_store %arg4[%c0_7, %c0_8, %c0_9], %12 {strides = array<i32>} : memref<1x32x1xf32, #tpu.memory_space<vmem>>, vector<1x32x1xf32>,
    %13 = arith.mulf %6, %6 : vector<32x128xf32>
    %cst_10 = arith.constant dense<0.000000e+00> : vector<32xf32>
    %14 = vector.multi_reduction <add>, %13, %cst_10 [1] : vector<32x128xf32> to vector<32xf32>
    %15 = vector.shape_cast %14 : vector<32xf32> to vector<32x1xf32>
    %c0_11 = arith.constant 0 : index
    %c0_12 = arith.constant 0 : index
    %c0_13 = arith.constant 0 : index
    %16 = vector.load %arg5[%c0_11, %c0_12, %c0_13] : memref<1x32x1xf32, #tpu.memory_space<vmem>>, vector<1x32x1xf32>
    %17 = vector.shape_cast %16 : vector<1x32x1xf32> to vector<32x1xf32>
    %18 = vector.shape_cast %15 : vector<32x1xf32> to vector<1x32x1xf32>
    tpu.vector_store %arg5[%c0_11, %c0_12, %c0_13], %18 {strides = array<i32>} : memref<1x32x1xf32, #tpu.memory_space<vmem>>, vector<1x32x1xf32>,
    return
  }
  func.func @transform_0(%arg0: i32) -> (i32, i32) {
    %c0_i32 = arith.constant 0 : i32
    %c0_i32_0 = arith.constant 0 : i32
    return %c0_i32, %arg0 : i32, i32
  }
  func.func @transform_1(%arg0: i32) -> (i32, i32) {
    %c0_i32 = arith.constant 0 : i32
    %c0_i32_0 = arith.constant 0 : i32
    %c0_i32_1 = arith.constant 0 : i32
    return %c0_i32, %c0_i32_0 : i32, i32
  }
  func.func @transform_2(%arg0: i32) -> (i32, i32) {
    %c0_i32 = arith.constant 0 : i32
    %c0_i32_0 = arith.constant 0 : i32
    return %c0_i32, %arg0 : i32, i32
  }
  func.func @transform_3(%arg0: i32) -> (i32, i32, i32) {
    %c0_i32 = arith.constant 0 : i32
    %c0_i32_0 = arith.constant 0 : i32
    %c0_i32_1 = arith.constant 0 : i32
    return %arg0, %c0_i32, %c0_i32_0 : i32, i32, i32
  }
  func.func @transform_4(%arg0: i32) -> (i32, i32, i32) {
    %c0_i32 = arith.constant 0 : i32
    %c0_i32_0 = arith.constant 0 : i32
    %c0_i32_1 = arith.constant 0 : i32
    return %arg0, %c0_i32, %c0_i32_0 : i32, i32, i32
  }
}

module attributes {stable_mosaic.version = 11 : i64} {
  func.func @_bn_apply_kernel(%arg0: i32, %arg1: memref<32x128xf32, #tpu.memory_space<vmem>>, %arg2: memref<32x1xf32, #tpu.memory_space<vmem>>, %arg3: memref<32x1xf32, #tpu.memory_space<vmem>>, %arg4: memref<32x128xf32, #tpu.memory_space<vmem>>) attributes {dimension_semantics = [#tpu.dimension_semantics<parallel>], iteration_bounds = array<i64: 4>, scalar_prefetch = 0 : i64, scratch_operands = 0 : i64, tpu.core_type = #tpu.core_type<tc>, window_params = [{transform_indices = @transform_0, window_bounds = array<i64: 32, 128>}, {pipeline_mode = #tpu.pipeline_mode<synchronous>, transform_indices = @transform_1, window_bounds = array<i64: 32, 1>}, {pipeline_mode = #tpu.pipeline_mode<synchronous>, transform_indices = @transform_2, window_bounds = array<i64: 32, 1>}, {transform_indices = @transform_3, window_bounds = array<i64: 32, 128>}]} {
    %c0 = arith.constant 0 : index
    %c0_0 = arith.constant 0 : index
    %0 = vector.load %arg1[%c0, %c0_0] : memref<32x128xf32, #tpu.memory_space<vmem>>, vector<32x128xf32>
    %c0_1 = arith.constant 0 : index
    %c0_2 = arith.constant 0 : index
    %1 = vector.load %arg2[%c0_1, %c0_2] : memref<32x1xf32, #tpu.memory_space<vmem>>, vector<32x1xf32>
    %2 = vector.broadcast %1 : vector<32x1xf32> to vector<32x128xf32>
    %3 = arith.mulf %0, %2 : vector<32x128xf32>
    %c0_3 = arith.constant 0 : index
    %c0_4 = arith.constant 0 : index
    %4 = vector.load %arg3[%c0_3, %c0_4] : memref<32x1xf32, #tpu.memory_space<vmem>>, vector<32x1xf32>
    %5 = vector.broadcast %4 : vector<32x1xf32> to vector<32x128xf32>
    %6 = arith.addf %3, %5 : vector<32x128xf32>
    %c0_5 = arith.constant 0 : index
    %c0_6 = arith.constant 0 : index
    %7 = vector.load %arg4[%c0_5, %c0_6] : memref<32x128xf32, #tpu.memory_space<vmem>>, vector<32x128xf32>
    tpu.vector_store %arg4[%c0_5, %c0_6], %6 {strides = array<i32>} : memref<32x128xf32, #tpu.memory_space<vmem>>, vector<32x128xf32>,
    return
  }
  func.func @transform_0(%arg0: i32) -> (i32, i32) {
    %c0_i32 = arith.constant 0 : i32
    %c0_i32_0 = arith.constant 0 : i32
    return %c0_i32, %arg0 : i32, i32
  }
  func.func @transform_1(%arg0: i32) -> (i32, i32) {
    %c0_i32 = arith.constant 0 : i32
    %c0_i32_0 = arith.constant 0 : i32
    %c0_i32_1 = arith.constant 0 : i32
    return %c0_i32, %c0_i32_0 : i32, i32
  }
  func.func @transform_2(%arg0: i32) -> (i32, i32) {
    %c0_i32 = arith.constant 0 : i32
    %c0_i32_0 = arith.constant 0 : i32
    %c0_i32_1 = arith.constant 0 : i32
    return %c0_i32, %c0_i32_0 : i32, i32
  }
  func.func @transform_3(%arg0: i32) -> (i32, i32) {
    %c0_i32 = arith.constant 0 : i32
    %c0_i32_0 = arith.constant 0 : i32
    return %c0_i32, %arg0 : i32, i32
  }
}

</mosaic_0001>

<llo_original>
// kernel: relu_conv_bn.3
$region0: #{relu_conv_bn.3}
  #allocation0 [shape = 'u32[]', space=smem, size = 0x4, offset = 0x4, fixed_abs, tag = 'smem constant byte address 0x4 - core index']
  #allocation1 [shape = 'u32[72,128]{1,0:T(1,128)}', space=vmem, size = 0x9000, scoped, tag = 'internal scratch']
  %s0 = inlined_call_operand.vmem [shape: f32[32,512], index: 0, kind: input, shape index: {}]
  %s1 = inlined_call_operand.vmem [shape: f32[32,1], index: 1, kind: input, shape index: {}]
  %s2 = inlined_call_operand.vmem [shape: f32[32,1], index: 2, kind: input, shape index: {}]
  %s3 = inlined_call_operand.vmem [shape: f32[32,512], index: 3, kind: output, shape index: {}]
  %s4 = sld [smem:[#allocation0]]
  $region117: #{relu_conv_bn.3} parent=0
    _
  %s6 = ssub.s32 1, %s4
  %s7 = scalar_select 0, %s6, %s4
  $region1: #{relu_conv_bn.3} parent=0
    #allocation2 [shape = 'u8[32768]{0}', space=vmem, size = 0x8000, scoped, tag = 'input window, operand 0']
    #allocation3 [shape = 'u8[32768]{0}', space=vmem, size = 0x8000, scoped, tag = 'output window, operand 0']
    loop: start=0, step=1, limit=6
    $region2: #{relu_conv_bn.3} parent=1 // loop_pre_header
      _
    $region3: #{relu_conv_bn.3} parent=1 // loop_header
      %s9 = sphi 0, %s13
      %p10 = scmp.ge.s32.totalorder %s9, 6
      %s19 = sphi 0, %s21
      %s22 = sphi 0, %s19
      %s23 = sphi 0, %s22
      %s39 = sphi 0, %s23
      %s43 = sphi 0, %s43
      %s45 = sphi 0, %s43
      %s46 = sphi 0, %s45
      %s60 = sphi 0, %s46
      %s64 = sphi 0, %s64
      %s66 = sphi 0, %s64
      %s67 = sphi 0, %s66
      %s81 = sphi 0, %s67
      %s87 = sphi 0, %s89
      %s90 = sphi 0, %s87
      %s91 = sphi 0, %s90
      %s107 = sphi 0, %s91
    $region4: #{relu_conv_bn.3} parent=1 // loop_header_branch
      %12 = sbr.rel (%p10) target = $region8
    $region5: #{relu_conv_bn.3} parent=1 // loop_body
      %s14 = ssub.s32 %s9, 1
      %s15 = ssub.s32 %s9, 2
      %s16 = sadd.s32 %s9, 1
      %s17 = ssub.s32 %s9, %s16
      %p18 = scmp.eq.s32.totalorder %s17, 0
      %s20 = sadd.s32 %s19, 1
      %s21 = scalar_select %p18, %s19, %s20
      %p24 = pneg %p18
      %p25 = scmp.eq.s32.totalorder %s9, 3
      %p26 = por %p24, %p25
      %p27 = scmp.ne.s32.totalorder %s19, %s22
      %p28 = scmp.eq.s32.totalorder %s9, 0
      %p29 = por %p27, %p28
      %p30 = scmp.ne.s32.totalorder %s19, %s22
      %p31 = scmp.eq.s32.totalorder %s14, 3
      %p32 = por %p30, %p31
      %p33 = scmp.ne.s32.totalorder %s22, %s23
      %p34 = scmp.eq.s32.totalorder %s14, 0
      %p35 = por %p33, %p34
      %p36 = scmp.ne.s32.totalorder %s22, %s23
      %p37 = scmp.eq.s32.totalorder %s15, 3
      %p38 = por %p36, %p37
      %p40 = scmp.ne.s32.totalorder %s23, %s39
      %p41 = scmp.eq.s32.totalorder %s15, 0
      %p42 = por %p40, %p41
      %s44 = sadd.s32 %s43, 1
      %p47 = scmp.eq.s32.totalorder %s9, 3
      %p48 = scmp.ne.s32.totalorder %s43, %s45
      %p49 = scmp.eq.s32.totalorder %s9, 0
      %p50 = por %p48, %p49
      %p51 = scmp.ne.s32.totalorder %s43, %s45
      %p52 = scmp.eq.s32.totalorder %s14, 3
      %p53 = por %p51, %p52
      %p54 = scmp.ne.s32.totalorder %s45, %s46
      %p55 = scmp.eq.s32.totalorder %s14, 0
      %p56 = por %p54, %p55
      %p57 = scmp.ne.s32.totalorder %s45, %s46
      %p58 = scmp.eq.s32.totalorder %s15, 3
      %p59 = por %p57, %p58
      %p61 = scmp.ne.s32.totalorder %s46, %s60
      %p62 = scmp.eq.s32.totalorder %s15, 0
      %p63 = por %p61, %p62
      %s65 = sadd.s32 %s64, 1
      %p68 = scmp.eq.s32.totalorder %s9, 3
      %p69 = scmp.ne.s32.totalorder %s64, %s66
      %p70 = scmp.eq.s32.totalorder %s9, 0
      %p71 = por %p69, %p70
      %p72 = scmp.ne.s32.totalorder %s64, %s66
      %p73 = scmp.eq.s32.totalorder %s14, 3
      %p74 = por %p72, %p73
      %p75 = scmp.ne.s32.totalorder %s66, %s67
      %p76 = scmp.eq.s32.totalorder %s14, 0
      %p77 = por %p75, %p76
      %p78 = scmp.ne.s32.totalorder %s66, %s67
      %p79 = scmp.eq.s32.totalorder %s15, 3
      %p80 = por %p78, %p79
      %p82 = scmp.ne.s32.totalorder %s67, %s81
      %p83 = scmp.eq.s32.totalorder %s15, 0
      %p84 = por %p82, %p83
      %s85 = ssub.s32 %s9, %s16
      %p86 = scmp.eq.s32.totalorder %s85, 0
      %s88 = sadd.s32 %s87, 1
      %s89 = scalar_select %p86, %s87, %s88
      %p92 = pneg %p86
      %p93 = scmp.eq.s32.totalorder %s9, 3
      %p94 = por %p92, %p93
      %p95 = scmp.ne.s32.totalorder %s87, %s90
      %p96 = scmp.eq.s32.totalorder %s9, 0
      %p97 = por %p95, %p96
      %p98 = scmp.ne.s32.totalorder %s87, %s90
      %p99 = scmp.eq.s32.totalorder %s14, 3
      %p100 = por %p98, %p99
      %p101 = scmp.ne.s32.totalorder %s90, %s91
      %p102 = scmp.eq.s32.totalorder %s14, 0
      %p103 = por %p101, %p102
      %p104 = scmp.ne.s32.totalorder %s90, %s91
      %p105 = scmp.eq.s32.totalorder %s15, 3
      %p106 = por %p104, %p105
      %p108 = scmp.ne.s32.totalorder %s91, %s107
      %p109 = scmp.eq.s32.totalorder %s15, 0
      %p110 = por %p108, %p109
      %p111 = scmp.le.s32.totalorder 1, %s9
      %p112 = scmp.lt.s32.totalorder %s9, 5
      %p113 = pnand %p111, %p112
      %p114 = pneg %p113
      // Predicated region
      $region9: #{relu_conv_bn.3} parent=5 // pred_check
        _
      $region10: #{relu_conv_bn.3} parent=5 // pred_check_branch
        %116 = sbr.rel (%p113) target = $region12
      $region11: #{relu_conv_bn.3} parent=5 // pred_region
        %s117 = ssub.s32 %s9, 1
        // Predicated region
        $region13: #{relu_conv_bn.3} parent=11 // pred_check
          %p118 = pneg %p56
        $region14: #{relu_conv_bn.3} parent=11 // pred_check_branch
          %120 = sbr.rel (%p118) target = $region16
        $region15: #{relu_conv_bn.3} parent=11 // pred_region
          _
        $region16: #{relu_conv_bn.3} parent=11 // pred_fallthru
          _
        // Predicated region
        $region17: #{relu_conv_bn.3} parent=11 // pred_check
          %p121 = pneg %p77
        $region18: #{relu_conv_bn.3} parent=11 // pred_check_branch
          %123 = sbr.rel (%p121) target = $region20
        $region19: #{relu_conv_bn.3} parent=11 // pred_region
          _
        $region20: #{relu_conv_bn.3} parent=11 // pred_fallthru
          _
      $region12: #{relu_conv_bn.3} parent=5 // pred_fallthru
        _
      %p124 = scmp.lt.s32.totalorder %s9, 4
      // Predicated region
      $region21: #{relu_conv_bn.3} parent=5 // pred_check
        %p125 = pneg %p124
      $region22: #{relu_conv_bn.3} parent=5 // pred_check_branch
        %127 = sbr.rel (%p125) target = $region24
      $region23: #{relu_conv_bn.3} parent=5 // pred_region
        // Predicated region
        $region25: #{relu_conv_bn.3} parent=23 // pred_check
          %p128 = pneg %p29
        $region26: #{relu_conv_bn.3} parent=23 // pred_check_branch
          %130 = sbr.rel (%p128) target = $region28
        $region27: #{relu_conv_bn.3} parent=23 // pred_region
          %s131 = sand.u32 %s19, 1
          %s132 = sand.u32 %s19, 1
          %s133 = smul.addr %s132, 32
          %s134 = scalar_lea.vmem [#allocation2], %s133
          %s135 = smul.addr %s9, 8
          %s136 = scalar_lea.vmem %s0, %s135
          // Predicated region
          $region29: #{relu_conv_bn.3} parent=27 // pred_check
            _
          $region30: #{relu_conv_bn.3} parent=27 // pred_check_branch
            %138 = sbr.rel (0) target = $region32
          $region31: #{relu_conv_bn.3} parent=27 // pred_region
            // Predicated region
            $region33: #{relu_conv_bn.3} parent=31 // pred_check
              _
            $region34: #{relu_conv_bn.3} parent=31 // pred_check_branch
              %140 = sbr.rel (0) target = $region36
            $region35: #{relu_conv_bn.3} parent=31 // pred_region
              // Predicated region
              $region48: #{relu_conv_bn.3} parent=35 // pred_check
                _
              $region49: #{relu_conv_bn.3} parent=35 // pred_check_branch
                %162 = sbr.rel (0) target = $region51
              $region50: #{relu_conv_bn.3} parent=35 // pred_region
                loop: start=0, step=1, limit=1
                $region52: #{relu_conv_bn.3} parent=50 // loop_pre_header
                  _
                $region53: #{relu_conv_bn.3} parent=50 // loop_header
                  %s164 = sphi 0, %s168
                  %p165 = scmp.ge.s32.totalorder %s164, 1
                  %s169 = sphi %s136, %s136
                  %s170 = sphi %s134, %s134
                $region54: #{relu_conv_bn.3} parent=50 // loop_header_branch
                  %167 = sbr.rel (%p165) target = $region58
                $region55: #{relu_conv_bn.3} parent=50 // loop_body
                  %v171 = vld [vmem:[%s169] sm:$0xff]
                  %172 = vst [vmem:[%s170] sm:$0xff] %v171
                  %v173 = vld [vmem:[%s169 + $0x20] sm:$0xff]
                  %174 = vst [vmem:[%s170 + $0x8] sm:$0xff] %v173
                  %v175 = vld [vmem:[%s169 + $0x40] sm:$0xff]
                  %176 = vst [vmem:[%s170 + $0x10] sm:$0xff] %v175
                  %v177 = vld [vmem:[%s169 + $0x60] sm:$0xff]
                  %178 = vst [vmem:[%s170 + $0x18] sm:$0xff] %v177
                $region56: #{relu_conv_bn.3} parent=50 // loop_footer
                  %s168 = sadd.s32 1, %s164
                $region57: #{relu_conv_bn.3} parent=50 // loop_footer_branch
                  %163 = sbr.rel target = $region53
                $region58: #{relu_conv_bn.3} parent=50 // loop_exit
                  _
              $region51: #{relu_conv_bn.3} parent=35 // pred_fallthru
                _
              // Predicated region
              $region59: #{relu_conv_bn.3} parent=35 // pred_check
                _
              $region60: #{relu_conv_bn.3} parent=35 // pred_check_branch
                %180 = sbr.rel target = $region62
              $region61: #{relu_conv_bn.3} parent=35 // pred_region
                _
              $region62: #{relu_conv_bn.3} parent=35 // pred_fallthru
                _
            $region36: #{relu_conv_bn.3} parent=31 // pred_fallthru
              _
            // Predicated region
            $region37: #{relu_conv_bn.3} parent=31 // pred_check
              _
            $region38: #{relu_conv_bn.3} parent=31 // pred_check_branch
              %142 = sbr.rel target = $region40
            $region39: #{relu_conv_bn.3} parent=31 // pred_region
              %s144 = ssub.s32 256, 1
              loop: start=0, step=1, limit=1
              $region41: #{relu_conv_bn.3} parent=39 // loop_pre_header
                _
              $region42: #{relu_conv_bn.3} parent=39 // loop_header
                %s146 = sphi 0, %s150
                %p147 = scmp.ge.s32.totalorder %s146, 1
                %s151 = sphi %s136, %s136
                %s152 = sphi %s134, %s134
              $region43: #{relu_conv_bn.3} parent=39 // loop_header_branch
                %149 = sbr.rel (%p147) target = $region47
              $region44: #{relu_conv_bn.3} parent=39 // loop_body
                %v153 = vld [vmem:[%s151] sm:%s144]
                %154 = vst [vmem:[%s152] sm:%s144] %v153
                %v155 = vld [vmem:[%s151 + $0x20] sm:%s144]
                %156 = vst [vmem:[%s152 + $0x8] sm:%s144] %v155
                %v157 = vld [vmem:[%s151 + $0x40] sm:%s144]
                %158 = vst [vmem:[%s152 + $0x10] sm:%s144] %v157
                %v159 = vld [vmem:[%s151 + $0x60] sm:%s144]
                %160 = vst [vmem:[%s152 + $0x18] sm:%s144] %v159
              $region45: #{relu_conv_bn.3} parent=39 // loop_footer
                %s150 = sadd.s32 1, %s146
              $region46: #{relu_conv_bn.3} parent=39 // loop_footer_branch
                %145 = sbr.rel target = $region42
              $region47: #{relu_conv_bn.3} parent=39 // loop_exit
                _
            $region40: #{relu_conv_bn.3} parent=31 // pred_fallthru
              _
          $region32: #{relu_conv_bn.3} parent=27 // pred_fallthru
            _
          %181 = vnop
        $region28: #{relu_conv_bn.3} parent=23 // pred_fallthru
          _
      $region24: #{relu_conv_bn.3} parent=5 // pred_fallthru
        _
      %p182 = scmp.le.s32.totalorder 1, %s9
      %p183 = scmp.lt.s32.totalorder %s9, 5
      %p184 = pnand %p182, %p183
      %p185 = pneg %p184
      // Predicated region
      $region63: #{relu_conv_bn.3} parent=5 // pred_check
        _
      $region64: #{relu_conv_bn.3} parent=5 // pred_check_branch
        %187 = sbr.rel (%p184) target = $region66
      $region65: #{relu_conv_bn.3} parent=5 // pred_region
        %s188 = ssub.s32 %s9, 1
        %s189 = sand.u32 %s22, 1
        %s190 = sand.u32 %s22, 1
        %s191 = smul.addr %s190, 32
        %s192 = scalar_lea.vmem [#allocation2], %s191
        // Predicated region
        $region67: #{relu_conv_bn.3} parent=65 // pred_check
          %p193 = pneg %p35
        $region68: #{relu_conv_bn.3} parent=65 // pred_check_branch
          %195 = sbr.rel (%p193) target = $region70
        $region69: #{relu_conv_bn.3} parent=65 // pred_region
          _
        $region70: #{relu_conv_bn.3} parent=65 // pred_fallthru
          _
        %s196 = sand.u32 %s22, 1
        %s197 = sand.u32 %s22, 1
        %s198 = smul.addr %s197, 32
        %s199 = scalar_lea.vmem [#allocation2], %s198
        %p200 = pneg %p35
        %p201 = pneg %p32
        %p202 = pneg %p56
        %p203 = pneg %p53
        %p204 = pneg %p77
        %p205 = pneg %p74
        %p206 = pneg %p103
        %p207 = pneg %p100
        %s208 = sand.u32 %s90, 1
        %s209 = sand.u32 %s90, 1
        %s210 = smul.addr %s209, 32
        %s211 = scalar_lea.vmem [#allocation3], %s210
        %v212 = vld [vmem:[%s192] sm:$0xff]
        %v213 = vld [vmem:[%s192 + $0x8] sm:$0xff]
        %v214 = vld [vmem:[%s192 + $0x10] sm:$0xff]
        %v215 = vld [vmem:[%s192 + $0x18] sm:$0xff]
        %v216 = vld [vmem:[%s1] sm:$0xff]
        %v217 = vld [vmem:[%s1 + $0x8] sm:$0xff]
        %v218 = vld [vmem:[%s1 + $0x10] sm:$0xff]
        %v219 = vld [vmem:[%s1 + $0x18] sm:$0xff]
        %221 = vset.pattern.permute.xlu0 0
        %222 = vperm.xlu0 %221, %v216
        %v223 = vpop.permute.xlu0 %222
        %226 = vset.pattern.permute.xlu0 0
        %227 = vperm.xlu0 %226, %v217
        %v228 = vpop.permute.xlu0 %227
        %231 = vset.pattern.permute.xlu0 0
        %232 = vperm.xlu0 %231, %v218
        %v233 = vpop.permute.xlu0 %232
        %236 = vset.pattern.permute.xlu0 0
        %237 = vperm.xlu0 %236, %v219
        %v238 = vpop.permute.xlu0 %237
        %v240 = vmul.f32 %v212, %v223
        %v241 = vmul.f32 %v213, %v228
        %v242 = vmul.f32 %v214, %v233
        %v243 = vmul.f32 %v215, %v238
        %v244 = vld [vmem:[%s2] sm:$0xff]
        %v245 = vld [vmem:[%s2 + $0x8] sm:$0xff]
        %v246 = vld [vmem:[%s2 + $0x10] sm:$0xff]
        %v247 = vld [vmem:[%s2 + $0x18] sm:$0xff]
        %249 = vset.pattern.permute.xlu0 0
        %250 = vperm.xlu0 %249, %v244
        %v251 = vpop.permute.xlu0 %250
        %254 = vset.pattern.permute.xlu0 0
        %255 = vperm.xlu0 %254, %v245
        %v256 = vpop.permute.xlu0 %255
        %259 = vset.pattern.permute.xlu0 0
        %260 = vperm.xlu0 %259, %v246
        %v261 = vpop.permute.xlu0 %260
        %264 = vset.pattern.permute.xlu0 0
        %265 = vperm.xlu0 %264, %v247
        %v266 = vpop.permute.xlu0 %265
        %v268 = vadd.f32 %v240, %v251
        %v269 = vadd.f32 %v241, %v256
        %v270 = vadd.f32 %v242, %v261
        %v271 = vadd.f32 %v243, %v266
        %272 = vst [vmem:[%s211] sm:$0xff] %v268
        %273 = vst [vmem:[%s211 + $0x8] sm:$0xff] %v269
        %274 = vst [vmem:[%s211 + $0x10] sm:$0xff] %v270
        %275 = vst [vmem:[%s211 + $0x18] sm:$0xff] %v271
        %s276 = sand.u32 %s90, 1
        %s277 = sand.u32 %s90, 1
        %s278 = smul.addr %s277, 32
        %s279 = scalar_lea.vmem [#allocation3], %s278
        // Predicated region
        $region71: #{relu_conv_bn.3} parent=65 // pred_check
          %p280 = pneg %p100
        $region72: #{relu_conv_bn.3} parent=65 // pred_check_branch
          %282 = sbr.rel (%p280) target = $region74
        $region73: #{relu_conv_bn.3} parent=65 // pred_region
          %s283 = smul.addr %s14, 8
          %s284 = scalar_lea.vmem %s3, %s283
          // Predicated region
          $region75: #{relu_conv_bn.3} parent=73 // pred_check
            _
          $region76: #{relu_conv_bn.3} parent=73 // pred_check_branch
            %286 = sbr.rel (0) target = $region78
          $region77: #{relu_conv_bn.3} parent=73 // pred_region
            // Predicated region
            $region79: #{relu_conv_bn.3} parent=77 // pred_check
              _
            $region80: #{relu_conv_bn.3} parent=77 // pred_check_branch
              %288 = sbr.rel (0) target = $region82
            $region81: #{relu_conv_bn.3} parent=77 // pred_region
              // Predicated region
              $region94: #{relu_conv_bn.3} parent=81 // pred_check
                _
              $region95: #{relu_conv_bn.3} parent=81 // pred_check_branch
                %310 = sbr.rel (0) target = $region97
              $region96: #{relu_conv_bn.3} parent=81 // pred_region
                loop: start=0, step=1, limit=1
                $region98: #{relu_conv_bn.3} parent=96 // loop_pre_header
                  _
                $region99: #{relu_conv_bn.3} parent=96 // loop_header
                  %s312 = sphi 0, %s316
                  %p313 = scmp.ge.s32.totalorder %s312, 1
                  %s317 = sphi %s279, %s279
                  %s318 = sphi %s284, %s284
                $region100: #{relu_conv_bn.3} parent=96 // loop_header_branch
                  %315 = sbr.rel (%p313) target = $region104
                $region101: #{relu_conv_bn.3} parent=96 // loop_body
                  %v319 = vld [vmem:[%s317] sm:$0xff]
                  %320 = vst [vmem:[%s318] sm:$0xff] %v319
                  %v321 = vld [vmem:[%s317 + $0x8] sm:$0xff]
                  %322 = vst [vmem:[%s318 + $0x20] sm:$0xff] %v321
                  %v323 = vld [vmem:[%s317 + $0x10] sm:$0xff]
                  %324 = vst [vmem:[%s318 + $0x40] sm:$0xff] %v323
                  %v325 = vld [vmem:[%s317 + $0x18] sm:$0xff]
                  %326 = vst [vmem:[%s318 + $0x60] sm:$0xff] %v325
                $region102: #{relu_conv_bn.3} parent=96 // loop_footer
                  %s316 = sadd.s32 1, %s312
                $region103: #{relu_conv_bn.3} parent=96 // loop_footer_branch
                  %311 = sbr.rel target = $region99
                $region104: #{relu_conv_bn.3} parent=96 // loop_exit
                  _
              $region97: #{relu_conv_bn.3} parent=81 // pred_fallthru
                _
              // Predicated region
              $region105: #{relu_conv_bn.3} parent=81 // pred_check
                _
              $region106: #{relu_conv_bn.3} parent=81 // pred_check_branch
                %328 = sbr.rel target = $region108
              $region107: #{relu_conv_bn.3} parent=81 // pred_region
                _
              $region108: #{relu_conv_bn.3} parent=81 // pred_fallthru
                _
            $region82: #{relu_conv_bn.3} parent=77 // pred_fallthru
              _
            // Predicated region
            $region83: #{relu_conv_bn.3} parent=77 // pred_check
              _
            $region84: #{relu_conv_bn.3} parent=77 // pred_check_branch
              %290 = sbr.rel target = $region86
            $region85: #{relu_conv_bn.3} parent=77 // pred_region
              %s292 = ssub.s32 256, 1
              loop: start=0, step=1, limit=1
              $region87: #{relu_conv_bn.3} parent=85 // loop_pre_header
                _
              $region88: #{relu_conv_bn.3} parent=85 // loop_header
                %s294 = sphi 0, %s298
                %p295 = scmp.ge.s32.totalorder %s294, 1
                %s299 = sphi %s279, %s279
                %s300 = sphi %s284, %s284
              $region89: #{relu_conv_bn.3} parent=85 // loop_header_branch
                %297 = sbr.rel (%p295) target = $region93
              $region90: #{relu_conv_bn.3} parent=85 // loop_body
                %v301 = vld [vmem:[%s299] sm:%s292]
                %302 = vst [vmem:[%s300] sm:%s292] %v301
                %v303 = vld [vmem:[%s299 + $0x8] sm:%s292]
                %304 = vst [vmem:[%s300 + $0x20] sm:%s292] %v303
                %v305 = vld [vmem:[%s299 + $0x10] sm:%s292]
                %306 = vst [vmem:[%s300 + $0x40] sm:%s292] %v305
                %v307 = vld [vmem:[%s299 + $0x18] sm:%s292]
                %308 = vst [vmem:[%s300 + $0x60] sm:%s292] %v307
              $region91: #{relu_conv_bn.3} parent=85 // loop_footer
                %s298 = sadd.s32 1, %s294
              $region92: #{relu_conv_bn.3} parent=85 // loop_footer_branch
                %293 = sbr.rel target = $region88
              $region93: #{relu_conv_bn.3} parent=85 // loop_exit
                _
            $region86: #{relu_conv_bn.3} parent=77 // pred_fallthru
              _
          $region78: #{relu_conv_bn.3} parent=73 // pred_fallthru
            _
          %329 = vnop
        $region74: #{relu_conv_bn.3} parent=65 // pred_fallthru
          _
      $region66: #{relu_conv_bn.3} parent=5 // pred_fallthru
        _
      %p330 = scmp.le.s32.totalorder 2, %s9
      // Predicated region
      $region109: #{relu_conv_bn.3} parent=5 // pred_check
        %p331 = pneg %p330
      $region110: #{relu_conv_bn.3} parent=5 // pred_check_branch
        %333 = sbr.rel (%p331) target = $region112
      $region111: #{relu_conv_bn.3} parent=5 // pred_region
        %s334 = ssub.s32 %s9, 2
        // Predicated region
        $region113: #{relu_conv_bn.3} parent=111 // pred_check
          %p335 = pneg %p106
        $region114: #{relu_conv_bn.3} parent=111 // pred_check_branch
          %337 = sbr.rel (%p335) target = $region116
        $region115: #{relu_conv_bn.3} parent=111 // pred_region
          %s338 = sand.u32 %s91, 1
          %s339 = sand.u32 %s91, 1
          %s340 = smul.addr %s339, 32
          %s341 = scalar_lea.vmem [#allocation3], %s340
        $region116: #{relu_conv_bn.3} parent=111 // pred_fallthru
          _
      $region112: #{relu_conv_bn.3} parent=5 // pred_fallthru
        _
    $region6: #{relu_conv_bn.3} parent=1 // loop_footer
      %s13 = sadd.s32 1, %s9
    $region7: #{relu_conv_bn.3} parent=1 // loop_footer_branch
      %8 = sbr.rel target = $region3
    $region8: #{relu_conv_bn.3} parent=1 // loop_exit
      _

// kernel: relu_conv_bn.2
$region0: #{relu_conv_bn.2}
  #allocation0 [shape = 'u32[]', space=smem, size = 0x4, offset = 0x4, fixed_abs, tag = 'smem constant byte address 0x4 - core index']
  #allocation1 [shape = 'u32[72,128]{1,0:T(1,128)}', space=vmem, size = 0x9000, scoped, tag = 'internal scratch']
  %s0 = inlined_call_operand.vmem [shape: f32[16,512], index: 0, kind: input, shape index: {}]
  %s1 = inlined_call_operand.vmem [shape: f32[32,16], index: 1, kind: input, shape index: {}]
  %s2 = inlined_call_operand.vmem [shape: f32[32,512], index: 2, kind: output, shape index: {0}]
  %s3 = inlined_call_operand.vmem [shape: f32[4,32,1], index: 3, kind: output, shape index: {1}]
  %s4 = inlined_call_operand.vmem [shape: f32[4,32,1], index: 4, kind: output, shape index: {2}]
  %5 = xla_tuple %s2, %s3, %s4
  %s6 = sld [smem:[#allocation0]]
  $region129: #{relu_conv_bn.2} parent=0
    _
  %s8 = ssub.s32 1, %s6
  %s9 = scalar_select 0, %s8, %s6
  $region1: #{relu_conv_bn.2} parent=0
    #allocation2 [shape = 'u8[16384]{0}', space=vmem, size = 0x4000, scoped, tag = 'input window, operand 0']
    #allocation3 [shape = 'u8[32768]{0}', space=vmem, size = 0x8000, scoped, tag = 'output window, operand 0']
    loop: start=0, step=1, limit=6
    $region2: #{relu_conv_bn.2} parent=1 // loop_pre_header
      _
    $region3: #{relu_conv_bn.2} parent=1 // loop_header
      %s11 = sphi 0, %s15
      %p12 = scmp.ge.s32.totalorder %s11, 6
      %s21 = sphi 0, %s23
      %s24 = sphi 0, %s21
      %s25 = sphi 0, %s24
      %s41 = sphi 0, %s25
      %s45 = sphi 0, %s45
      %s47 = sphi 0, %s45
      %s48 = sphi 0, %s47
      %s62 = sphi 0, %s48
      %s68 = sphi 0, %s70
      %s71 = sphi 0, %s68
      %s72 = sphi 0, %s71
      %s88 = sphi 0, %s72
      %s94 = sphi 0, %s96
      %s97 = sphi 0, %s94
      %s98 = sphi 0, %s97
      %s114 = sphi 0, %s98
      %s120 = sphi 0, %s122
      %s123 = sphi 0, %s120
      %s124 = sphi 0, %s123
      %s140 = sphi 0, %s124
    $region4: #{relu_conv_bn.2} parent=1 // loop_header_branch
      %14 = sbr.rel (%p12) target = $region8
    $region5: #{relu_conv_bn.2} parent=1 // loop_body
      %s16 = ssub.s32 %s11, 1
      %s17 = ssub.s32 %s11, 2
      %s18 = sadd.s32 %s11, 1
      %s19 = ssub.s32 %s11, %s18
      %p20 = scmp.eq.s32.totalorder %s19, 0
      %s22 = sadd.s32 %s21, 1
      %s23 = scalar_select %p20, %s21, %s22
      %p26 = pneg %p20
      %p27 = scmp.eq.s32.totalorder %s11, 3
      %p28 = por %p26, %p27
      %p29 = scmp.ne.s32.totalorder %s21, %s24
      %p30 = scmp.eq.s32.totalorder %s11, 0
      %p31 = por %p29, %p30
      %p32 = scmp.ne.s32.totalorder %s21, %s24
      %p33 = scmp.eq.s32.totalorder %s16, 3
      %p34 = por %p32, %p33
      %p35 = scmp.ne.s32.totalorder %s24, %s25
      %p36 = scmp.eq.s32.totalorder %s16, 0
      %p37 = por %p35, %p36
      %p38 = scmp.ne.s32.totalorder %s24, %s25
      %p39 = scmp.eq.s32.totalorder %s17, 3
      %p40 = por %p38, %p39
      %p42 = scmp.ne.s32.totalorder %s25, %s41
      %p43 = scmp.eq.s32.totalorder %s17, 0
      %p44 = por %p42, %p43
      %s46 = sadd.s32 %s45, 1
      %p49 = scmp.eq.s32.totalorder %s11, 3
      %p50 = scmp.ne.s32.totalorder %s45, %s47
      %p51 = scmp.eq.s32.totalorder %s11, 0
      %p52 = por %p50, %p51
      %p53 = scmp.ne.s32.totalorder %s45, %s47
      %p54 = scmp.eq.s32.totalorder %s16, 3
      %p55 = por %p53, %p54
      %p56 = scmp.ne.s32.totalorder %s47, %s48
      %p57 = scmp.eq.s32.totalorder %s16, 0
      %p58 = por %p56, %p57
      %p59 = scmp.ne.s32.totalorder %s47, %s48
      %p60 = scmp.eq.s32.totalorder %s17, 3
      %p61 = por %p59, %p60
      %p63 = scmp.ne.s32.totalorder %s48, %s62
      %p64 = scmp.eq.s32.totalorder %s17, 0
      %p65 = por %p63, %p64
      %s66 = ssub.s32 %s11, %s18
      %p67 = scmp.eq.s32.totalorder %s66, 0
      %s69 = sadd.s32 %s68, 1
      %s70 = scalar_select %p67, %s68, %s69
      %p73 = pneg %p67
      %p74 = scmp.eq.s32.totalorder %s11, 3
      %p75 = por %p73, %p74
      %p76 = scmp.ne.s32.totalorder %s68, %s71
      %p77 = scmp.eq.s32.totalorder %s11, 0
      %p78 = por %p76, %p77
      %p79 = scmp.ne.s32.totalorder %s68, %s71
      %p80 = scmp.eq.s32.totalorder %s16, 3
      %p81 = por %p79, %p80
      %p82 = scmp.ne.s32.totalorder %s71, %s72
      %p83 = scmp.eq.s32.totalorder %s16, 0
      %p84 = por %p82, %p83
      %p85 = scmp.ne.s32.totalorder %s71, %s72
      %p86 = scmp.eq.s32.totalorder %s17, 3
      %p87 = por %p85, %p86
      %p89 = scmp.ne.s32.totalorder %s72, %s88
      %p90 = scmp.eq.s32.totalorder %s17, 0
      %p91 = por %p89, %p90
      %s92 = ssub.s32 %s11, %s18
      %p93 = scmp.eq.s32.totalorder %s92, 0
      %s95 = sadd.s32 %s94, 1
      %s96 = scalar_select %p93, %s94, %s95
      %p99 = pneg %p93
      %p100 = scmp.eq.s32.totalorder %s11, 3
      %p101 = por %p99, %p100
      %p102 = scmp.ne.s32.totalorder %s94, %s97
      %p103 = scmp.eq.s32.totalorder %s11, 0
      %p104 = por %p102, %p103
      %p105 = scmp.ne.s32.totalorder %s94, %s97
      %p106 = scmp.eq.s32.totalorder %s16, 3
      %p107 = por %p105, %p106
      %p108 = scmp.ne.s32.totalorder %s97, %s98
      %p109 = scmp.eq.s32.totalorder %s16, 0
      %p110 = por %p108, %p109
      %p111 = scmp.ne.s32.totalorder %s97, %s98
      %p112 = scmp.eq.s32.totalorder %s17, 3
      %p113 = por %p111, %p112
      %p115 = scmp.ne.s32.totalorder %s98, %s114
      %p116 = scmp.eq.s32.totalorder %s17, 0
      %p117 = por %p115, %p116
      %s118 = ssub.s32 %s11, %s18
      %p119 = scmp.eq.s32.totalorder %s118, 0
      %s121 = sadd.s32 %s120, 1
      %s122 = scalar_select %p119, %s120, %s121
      %p125 = pneg %p119
      %p126 = scmp.eq.s32.totalorder %s11, 3
      %p127 = por %p125, %p126
      %p128 = scmp.ne.s32.totalorder %s120, %s123
      %p129 = scmp.eq.s32.totalorder %s11, 0
      %p130 = por %p128, %p129
      %p131 = scmp.ne.s32.totalorder %s120, %s123
      %p132 = scmp.eq.s32.totalorder %s16, 3
      %p133 = por %p131, %p132
      %p134 = scmp.ne.s32.totalorder %s123, %s124
      %p135 = scmp.eq.s32.totalorder %s16, 0
      %p136 = por %p134, %p135
      %p137 = scmp.ne.s32.totalorder %s123, %s124
      %p138 = scmp.eq.s32.totalorder %s17, 3
      %p139 = por %p137, %p138
      %p141 = scmp.ne.s32.totalorder %s124, %s140
      %p142 = scmp.eq.s32.totalorder %s17, 0
      %p143 = por %p141, %p142
      %p144 = scmp.le.s32.totalorder 1, %s11
      %p145 = scmp.lt.s32.totalorder %s11, 5
      %p146 = pnand %p144, %p145
      %p147 = pneg %p146
      // Predicated region
      $region9: #{relu_conv_bn.2} parent=5 // pred_check
        _
      $region10: #{relu_conv_bn.2} parent=5 // pred_check_branch
        %149 = sbr.rel (%p146) target = $region12
      $region11: #{relu_conv_bn.2} parent=5 // pred_region
        %s150 = ssub.s32 %s11, 1
        // Predicated region
        $region13: #{relu_conv_bn.2} parent=11 // pred_check
          %p151 = pneg %p58
        $region14: #{relu_conv_bn.2} parent=11 // pred_check_branch
          %153 = sbr.rel (%p151) target = $region16
        $region15: #{relu_conv_bn.2} parent=11 // pred_region
          _
        $region16: #{relu_conv_bn.2} parent=11 // pred_fallthru
          _
      $region12: #{relu_conv_bn.2} parent=5 // pred_fallthru
        _
      %p154 = scmp.lt.s32.totalorder %s11, 4
      // Predicated region
      $region17: #{relu_conv_bn.2} parent=5 // pred_check
        %p155 = pneg %p154
      $region18: #{relu_conv_bn.2} parent=5 // pred_check_branch
        %157 = sbr.rel (%p155) target = $region20
      $region19: #{relu_conv_bn.2} parent=5 // pred_region
        // Predicated region
        $region21: #{relu_conv_bn.2} parent=19 // pred_check
          %p158 = pneg %p31
        $region22: #{relu_conv_bn.2} parent=19 // pred_check_branch
          %160 = sbr.rel (%p158) target = $region24
        $region23: #{relu_conv_bn.2} parent=19 // pred_region
          %s161 = sand.u32 %s21, 1
          %s162 = sand.u32 %s21, 1
          %s163 = smul.addr %s162, 16
          %s164 = scalar_lea.vmem [#allocation2], %s163
          %s165 = smul.addr %s11, 8
          %s166 = scalar_lea.vmem %s0, %s165
          // Predicated region
          $region25: #{relu_conv_bn.2} parent=23 // pred_check
            _
          $region26: #{relu_conv_bn.2} parent=23 // pred_check_branch
            %168 = sbr.rel (0) target = $region28
          $region27: #{relu_conv_bn.2} parent=23 // pred_region
            // Predicated region
            $region29: #{relu_conv_bn.2} parent=27 // pred_check
              _
            $region30: #{relu_conv_bn.2} parent=27 // pred_check_branch
              %170 = sbr.rel (0) target = $region32
            $region31: #{relu_conv_bn.2} parent=27 // pred_region
              // Predicated region
              $region44: #{relu_conv_bn.2} parent=31 // pred_check
                _
              $region45: #{relu_conv_bn.2} parent=31 // pred_check_branch
                %188 = sbr.rel (0) target = $region47
              $region46: #{relu_conv_bn.2} parent=31 // pred_region
                loop: start=0, step=1, limit=1
                $region48: #{relu_conv_bn.2} parent=46 // loop_pre_header
                  _
                $region49: #{relu_conv_bn.2} parent=46 // loop_header
                  %s190 = sphi 0, %s194
                  %p191 = scmp.ge.s32.totalorder %s190, 1
                  %s195 = sphi %s166, %s166
                  %s196 = sphi %s164, %s164
                $region50: #{relu_conv_bn.2} parent=46 // loop_header_branch
                  %193 = sbr.rel (%p191) target = $region54
                $region51: #{relu_conv_bn.2} parent=46 // loop_body
                  %v197 = vld [vmem:[%s195] sm:$0xff]
                  %198 = vst [vmem:[%s196] sm:$0xff] %v197
                  %v199 = vld [vmem:[%s195 + $0x20] sm:$0xff]
                  %200 = vst [vmem:[%s196 + $0x8] sm:$0xff] %v199
                $region52: #{relu_conv_bn.2} parent=46 // loop_footer
                  %s194 = sadd.s32 1, %s190
                $region53: #{relu_conv_bn.2} parent=46 // loop_footer_branch
                  %189 = sbr.rel target = $region49
                $region54: #{relu_conv_bn.2} parent=46 // loop_exit
                  _
              $region47: #{relu_conv_bn.2} parent=31 // pred_fallthru
                _
              // Predicated region
              $region55: #{relu_conv_bn.2} parent=31 // pred_check
                _
              $region56: #{relu_conv_bn.2} parent=31 // pred_check_branch
                %202 = sbr.rel target = $region58
              $region57: #{relu_conv_bn.2} parent=31 // pred_region
                _
              $region58: #{relu_conv_bn.2} parent=31 // pred_fallthru
                _
            $region32: #{relu_conv_bn.2} parent=27 // pred_fallthru
              _
            // Predicated region
            $region33: #{relu_conv_bn.2} parent=27 // pred_check
              _
            $region34: #{relu_conv_bn.2} parent=27 // pred_check_branch
              %172 = sbr.rel target = $region36
            $region35: #{relu_conv_bn.2} parent=27 // pred_region
              %s174 = ssub.s32 256, 1
              loop: start=0, step=1, limit=1
              $region37: #{relu_conv_bn.2} parent=35 // loop_pre_header
                _
              $region38: #{relu_conv_bn.2} parent=35 // loop_header
                %s176 = sphi 0, %s180
                %p177 = scmp.ge.s32.totalorder %s176, 1
                %s181 = sphi %s166, %s166
                %s182 = sphi %s164, %s164
              $region39: #{relu_conv_bn.2} parent=35 // loop_header_branch
                %179 = sbr.rel (%p177) target = $region43
              $region40: #{relu_conv_bn.2} parent=35 // loop_body
                %v183 = vld [vmem:[%s181] sm:%s174]
                %184 = vst [vmem:[%s182] sm:%s174] %v183
                %v185 = vld [vmem:[%s181 + $0x20] sm:%s174]
                %186 = vst [vmem:[%s182 + $0x8] sm:%s174] %v185
              $region41: #{relu_conv_bn.2} parent=35 // loop_footer
                %s180 = sadd.s32 1, %s176
              $region42: #{relu_conv_bn.2} parent=35 // loop_footer_branch
                %175 = sbr.rel target = $region38
              $region43: #{relu_conv_bn.2} parent=35 // loop_exit
                _
            $region36: #{relu_conv_bn.2} parent=27 // pred_fallthru
              _
          $region28: #{relu_conv_bn.2} parent=23 // pred_fallthru
            _
          %203 = vnop
        $region24: #{relu_conv_bn.2} parent=19 // pred_fallthru
          _
      $region20: #{relu_conv_bn.2} parent=5 // pred_fallthru
        _
      %p204 = scmp.le.s32.totalorder 1, %s11
      %p205 = scmp.lt.s32.totalorder %s11, 5
      %p206 = pnand %p204, %p205
      %p207 = pneg %p206
      // Predicated region
      $region59: #{relu_conv_bn.2} parent=5 // pred_check
        _
      $region60: #{relu_conv_bn.2} parent=5 // pred_check_branch
        %209 = sbr.rel (%p206) target = $region62
      $region61: #{relu_conv_bn.2} parent=5 // pred_region
        %s210 = ssub.s32 %s11, 1
        %s211 = sand.u32 %s24, 1
        %s212 = sand.u32 %s24, 1
        %s213 = smul.addr %s212, 16
        %s214 = scalar_lea.vmem [#allocation2], %s213
        // Predicated region
        $region63: #{relu_conv_bn.2} parent=61 // pred_check
          %p215 = pneg %p37
        $region64: #{relu_conv_bn.2} parent=61 // pred_check_branch
          %217 = sbr.rel (%p215) target = $region66
        $region65: #{relu_conv_bn.2} parent=61 // pred_region
          _
        $region66: #{relu_conv_bn.2} parent=61 // pred_fallthru
          _
        %s218 = sand.u32 %s24, 1
        %s219 = sand.u32 %s24, 1
        %s220 = smul.addr %s219, 16
        %s221 = scalar_lea.vmem [#allocation2], %s220
        %p222 = pneg %p37
        %p223 = pneg %p34
        %p224 = pneg %p58
        %p225 = pneg %p55
        %p226 = pneg %p84
        %p227 = pneg %p81
        %s228 = sand.u32 %s71, 1
        %s229 = sand.u32 %s71, 1
        %s230 = smul.addr %s229, 32
        %s231 = scalar_lea.vmem [#allocation3], %s230
        %p232 = pneg %p110
        %p233 = pneg %p107
        %p234 = scmp.lt.s32.totalorder %s16, 3
        %s235 = scalar_select %p234, %s16, 3
        %s236 = smul.addr %s235, 4
        %s237 = smul.addr %s236, 8
        %s238 = scalar_lea.vmem %s3, %s237
        %p239 = pneg %p136
        %p240 = pneg %p133
        %p241 = scmp.lt.s32.totalorder %s16, 3
        %s242 = scalar_select %p241, %s16, 3
        %s243 = smul.addr %s242, 4
        %s244 = smul.addr %s243, 8
        %s245 = scalar_lea.vmem %s4, %s244
        %p246 = scmp.lt.s32.totalorder %s16, 3
        %s247 = scalar_select %p246, %s16, 3
        %s248 = smul.addr %s247, 4
        %s249 = smul.addr %s248, 8
        %s250 = scalar_lea.vmem %s3, %s249
        %p251 = scmp.lt.s32.totalorder %s16, 3
        %s252 = scalar_select %p251, %s16, 3
        %s253 = smul.addr %s252, 4
        %s254 = smul.addr %s253, 8
        %s255 = scalar_lea.vmem %s4, %s254
        %v257 = vld [vmem:[%s214] sm:$0xff]
        %v258 = vld [vmem:[%s214 + $0x8] sm:$0xff]
        %v259 = vmax.f32 %v257, 0.0
        %v260 = vmax.f32 %v258, 0.0
        %v261 = vld [vmem:[%s1] sm:$0xff]
        %v262 = vld [vmem:[%s1 + $0x8] sm:$0xff]
        %v263 = vld [vmem:[%s1 + $0x10] sm:$0xff]
        %v264 = vld [vmem:[%s1 + $0x18] sm:$0xff]
        %v265 = vpack.c.bf16 %v262, %v261
        %v266 = vpack.c.bf16 %v264, %v263
        %v267 = vpack.c.bf16 %v260, %v259
        %vm268 = vcmask 130048
        %v270 = vsel %vm268, %v265, 0
        %v273 = vsel %vm268, %v266, 0
        %275 = vmatpush.bf16.msra.mxu0 0
        %276 = vmatpush.bf16.msra.mxu0 0
        %277 = vmatpush.bf16.msra.mxu0 0
        %278 = vmatpush.bf16.msra.mxu0 0
        %279 = vmatpush.bf16.msra.mxu0 0
        %280 = vmatpush.bf16.msra.mxu0 0
        %281 = vmatpush.bf16.msra.mxu0 0
        %282 = vmatpush.bf16.msra.mxu0 %v267
        %283 = vmatmul.bf16.gmra.mxu0 %v270
        %v284 = vpop.f32.mrf.mxu0
        %v285 = vadd.f32 0.0, %v284
        %v286 = vpop.f32.mrf.mxu0
        %v287 = vadd.f32 0.0, %v286
        %288 = vmatmul.bf16.gmra.mxu0 %v273
        %v289 = vpop.f32.mrf.mxu0
        %v290 = vadd.f32 0.0, %v289
        %v291 = vpop.f32.mrf.mxu0
        %v292 = vadd.f32 0.0, %v291
        %293 = vdwg.mxu0
        %294 = vst [vmem:[%s231] sm:$0xff] %v285
        %295 = vst [vmem:[%s231 + $0x8] sm:$0xff] %v287
        %296 = vst [vmem:[%s231 + $0x10] sm:$0xff] %v290
        %297 = vst [vmem:[%s231 + $0x18] sm:$0xff] %v292
        %298 = vadd.xlane.f32.xlu0 %v285
        %v299 = vpop.xlane.xlu0 %298
        %300 = vadd.xlane.f32.xlu0 %v287
        %v301 = vpop.xlane.xlu0 %300
        %302 = vadd.xlane.f32.xlu0 %v290
        %v303 = vpop.xlane.xlu0 %302
        %304 = vadd.xlane.f32.xlu0 %v292
        %v305 = vpop.xlane.xlu0 %304
        %vm306 = vcmask 7168
        %307 = vst.msk [vmem:[%s250] sm:$0xff] %vm306, %v299
        %308 = vst.msk [vmem:[%s250 + $0x8] sm:$0xff] %vm306, %v301
        %309 = vst.msk [vmem:[%s250 + $0x10] sm:$0xff] %vm306, %v303
        %310 = vst.msk [vmem:[%s250 + $0x18] sm:$0xff] %vm306, %v305
        %v311 = vmul.f32 %v285, %v285
        %v312 = vmul.f32 %v287, %v287
        %v313 = vmul.f32 %v290, %v290
        %v314 = vmul.f32 %v292, %v292
        %315 = vadd.xlane.f32.xlu0 %v311
        %v316 = vpop.xlane.xlu0 %315
        %317 = vadd.xlane.f32.xlu0 %v312
        %v318 = vpop.xlane.xlu0 %317
        %319 = vadd.xlane.f32.xlu0 %v313
        %v320 = vpop.xlane.xlu0 %319
        %321 = vadd.xlane.f32.xlu0 %v314
        %v322 = vpop.xlane.xlu0 %321
        %323 = vst.msk [vmem:[%s255] sm:$0xff] %vm306, %v316
        %324 = vst.msk [vmem:[%s255 + $0x8] sm:$0xff] %vm306, %v318
        %325 = vst.msk [vmem:[%s255 + $0x10] sm:$0xff] %vm306, %v320
        %326 = vst.msk [vmem:[%s255 + $0x18] sm:$0xff] %vm306, %v322
        %s327 = sand.u32 %s71, 1
        %s328 = sand.u32 %s71, 1
        %s329 = smul.addr %s328, 32
        %s330 = scalar_lea.vmem [#allocation3], %s329
        %p331 = scmp.lt.s32.totalorder %s16, 3
        %s332 = scalar_select %p331, %s16, 3
        %s333 = smul.addr %s332, 4
        %s334 = smul.addr %s333, 8
        %s335 = scalar_lea.vmem %s3, %s334
        %p336 = scmp.lt.s32.totalorder %s16, 3
        %s337 = scalar_select %p336, %s16, 3
        %s338 = smul.addr %s337, 4
        %s339 = smul.addr %s338, 8
        %s340 = scalar_lea.vmem %s4, %s339
        // Predicated region
        $region67: #{relu_conv_bn.2} parent=61 // pred_check
          %p341 = pneg %p81
        $region68: #{relu_conv_bn.2} parent=61 // pred_check_branch
          %343 = sbr.rel (%p341) target = $region70
        $region69: #{relu_conv_bn.2} parent=61 // pred_region
          %s344 = smul.addr %s16, 8
          %s345 = scalar_lea.vmem %s2, %s344
          // Predicated region
          $region71: #{relu_conv_bn.2} parent=69 // pred_check
            _
          $region72: #{relu_conv_bn.2} parent=69 // pred_check_branch
            %347 = sbr.rel (0) target = $region74
          $region73: #{relu_conv_bn.2} parent=69 // pred_region
            // Predicated region
            $region75: #{relu_conv_bn.2} parent=73 // pred_check
              _
            $region76: #{relu_conv_bn.2} parent=73 // pred_check_branch
              %349 = sbr.rel (0) target = $region78
            $region77: #{relu_conv_bn.2} parent=73 // pred_region
              // Predicated region
              $region90: #{relu_conv_bn.2} parent=77 // pred_check
                _
              $region91: #{relu_conv_bn.2} parent=77 // pred_check_branch
                %371 = sbr.rel (0) target = $region93
              $region92: #{relu_conv_bn.2} parent=77 // pred_region
                loop: start=0, step=1, limit=1
                $region94: #{relu_conv_bn.2} parent=92 // loop_pre_header
                  _
                $region95: #{relu_conv_bn.2} parent=92 // loop_header
                  %s373 = sphi 0, %s377
                  %p374 = scmp.ge.s32.totalorder %s373, 1
                  %s378 = sphi %s330, %s330
                  %s379 = sphi %s345, %s345
                $region96: #{relu_conv_bn.2} parent=92 // loop_header_branch
                  %376 = sbr.rel (%p374) target = $region100
                $region97: #{relu_conv_bn.2} parent=92 // loop_body
                  %v380 = vld [vmem:[%s378] sm:$0xff]
                  %381 = vst [vmem:[%s379] sm:$0xff] %v380
                  %v382 = vld [vmem:[%s378 + $0x8] sm:$0xff]
                  %383 = vst [vmem:[%s379 + $0x20] sm:$0xff] %v382
                  %v384 = vld [vmem:[%s378 + $0x10] sm:$0xff]
                  %385 = vst [vmem:[%s379 + $0x40] sm:$0xff] %v384
                  %v386 = vld [vmem:[%s378 + $0x18] sm:$0xff]
                  %387 = vst [vmem:[%s379 + $0x60] sm:$0xff] %v386
                $region98: #{relu_conv_bn.2} parent=92 // loop_footer
                  %s377 = sadd.s32 1, %s373
                $region99: #{relu_conv_bn.2} parent=92 // loop_footer_branch
                  %372 = sbr.rel target = $region95
                $region100: #{relu_conv_bn.2} parent=92 // loop_exit
                  _
              $region93: #{relu_conv_bn.2} parent=77 // pred_fallthru
                _
              // Predicated region
              $region101: #{relu_conv_bn.2} parent=77 // pred_check
                _
              $region102: #{relu_conv_bn.2} parent=77 // pred_check_branch
                %389 = sbr.rel target = $region104
              $region103: #{relu_conv_bn.2} parent=77 // pred_region
                _
              $region104: #{relu_conv_bn.2} parent=77 // pred_fallthru
                _
            $region78: #{relu_conv_bn.2} parent=73 // pred_fallthru
              _
            // Predicated region
            $region79: #{relu_conv_bn.2} parent=73 // pred_check
              _
            $region80: #{relu_conv_bn.2} parent=73 // pred_check_branch
              %351 = sbr.rel target = $region82
            $region81: #{relu_conv_bn.2} parent=73 // pred_region
              %s353 = ssub.s32 256, 1
              loop: start=0, step=1, limit=1
              $region83: #{relu_conv_bn.2} parent=81 // loop_pre_header
                _
              $region84: #{relu_conv_bn.2} parent=81 // loop_header
                %s355 = sphi 0, %s359
                %p356 = scmp.ge.s32.totalorder %s355, 1
                %s360 = sphi %s330, %s330
                %s361 = sphi %s345, %s345
              $region85: #{relu_conv_bn.2} parent=81 // loop_header_branch
                %358 = sbr.rel (%p356) target = $region89
              $region86: #{relu_conv_bn.2} parent=81 // loop_body
                %v362 = vld [vmem:[%s360] sm:%s353]
                %363 = vst [vmem:[%s361] sm:%s353] %v362
                %v364 = vld [vmem:[%s360 + $0x8] sm:%s353]
                %365 = vst [vmem:[%s361 + $0x20] sm:%s353] %v364
                %v366 = vld [vmem:[%s360 + $0x10] sm:%s353]
                %367 = vst [vmem:[%s361 + $0x40] sm:%s353] %v366
                %v368 = vld [vmem:[%s360 + $0x18] sm:%s353]
                %369 = vst [vmem:[%s361 + $0x60] sm:%s353] %v368
              $region87: #{relu_conv_bn.2} parent=81 // loop_footer
                %s359 = sadd.s32 1, %s355
              $region88: #{relu_conv_bn.2} parent=81 // loop_footer_branch
                %354 = sbr.rel target = $region84
              $region89: #{relu_conv_bn.2} parent=81 // loop_exit
                _
            $region82: #{relu_conv_bn.2} parent=73 // pred_fallthru
              _
          $region74: #{relu_conv_bn.2} parent=69 // pred_fallthru
            _
          %390 = vnop
        $region70: #{relu_conv_bn.2} parent=61 // pred_fallthru
          _
        // Predicated region
        $region105: #{relu_conv_bn.2} parent=61 // pred_check
          %p391 = pneg %p107
        $region106: #{relu_conv_bn.2} parent=61 // pred_check_branch
          %393 = sbr.rel (%p391) target = $region108
        $region107: #{relu_conv_bn.2} parent=61 // pred_region
          _
        $region108: #{relu_conv_bn.2} parent=61 // pred_fallthru
          _
        // Predicated region
        $region109: #{relu_conv_bn.2} parent=61 // pred_check
          %p394 = pneg %p133
        $region110: #{relu_conv_bn.2} parent=61 // pred_check_branch
          %396 = sbr.rel (%p394) target = $region112
        $region111: #{relu_conv_bn.2} parent=61 // pred_region
          _
        $region112: #{relu_conv_bn.2} parent=61 // pred_fallthru
          _
      $region62: #{relu_conv_bn.2} parent=5 // pred_fallthru
        _
      %p397 = scmp.le.s32.totalorder 2, %s11
      // Predicated region
      $region113: #{relu_conv_bn.2} parent=5 // pred_check
        %p398 = pneg %p397
      $region114: #{relu_conv_bn.2} parent=5 // pred_check_branch
        %400 = sbr.rel (%p398) target = $region116
      $region115: #{relu_conv_bn.2} parent=5 // pred_region
        %s401 = ssub.s32 %s11, 2
        // Predicated region
        $region117: #{relu_conv_bn.2} parent=115 // pred_check
          %p402 = pneg %p87
        $region118: #{relu_conv_bn.2} parent=115 // pred_check_branch
          %404 = sbr.rel (%p402) target = $region120
        $region119: #{relu_conv_bn.2} parent=115 // pred_region
          %s405 = sand.u32 %s72, 1
          %s406 = sand.u32 %s72, 1
          %s407 = smul.addr %s406, 32
          %s408 = scalar_lea.vmem [#allocation3], %s407
        $region120: #{relu_conv_bn.2} parent=115 // pred_fallthru
          _
        // Predicated region
        $region121: #{relu_conv_bn.2} parent=115 // pred_check
          %p409 = pneg %p113
        $region122: #{relu_conv_bn.2} parent=115 // pred_check_branch
          %411 = sbr.rel (%p409) target = $region124
        $region123: #{relu_conv_bn.2} parent=115 // pred_region
          %p412 = scmp.lt.s32.totalorder %s17, 3
          %s413 = scalar_select %p412, %s17, 3
          %s414 = smul.addr %s413, 4
          %s415 = smul.addr %s414, 8
          %s416 = scalar_lea.vmem %s3, %s415
        $region124: #{relu_conv_bn.2} parent=115 // pred_fallthru
          _
        // Predicated region
        $region125: #{relu_conv_bn.2} parent=115 // pred_check
          %p417 = pneg %p139
        $region126: #{relu_conv_bn.2} parent=115 // pred_check_branch
          %419 = sbr.rel (%p417) target = $region128
        $region127: #{relu_conv_bn.2} parent=115 // pred_region
          %p420 = scmp.lt.s32.totalorder %s17, 3
          %s421 = scalar_select %p420, %s17, 3
          %s422 = smul.addr %s421, 4
          %s423 = smul.addr %s422, 8
          %s424 = scalar_lea.vmem %s4, %s423
        $region128: #{relu_conv_bn.2} parent=115 // pred_fallthru
          _
      $region116: #{relu_conv_bn.2} parent=5 // pred_fallthru
        _
    $region6: #{relu_conv_bn.2} parent=1 // loop_footer
      %s15 = sadd.s32 1, %s11
    $region7: #{relu_conv_bn.2} parent=1 // loop_footer_branch
      %10 = sbr.rel target = $region3
    $region8: #{relu_conv_bn.2} parent=1 // loop_exit
      _

</llo_original>
